<compile_context>
chip_gen: v7x
topology: tpu7x:2x2x1
jax: 0.10.0
libtpu: 0.0.40
codegen_flags: <defaults>
</compile_context>

<pallas_src>
import functools

import jax
import jax.numpy as jnp
from jax.experimental import pallas as pl
from jax.experimental.pallas import tpu as pltpu

# MLP layer sizes from the module __init__
LAYER_SIZES = [1, 20, 64, 128, 64, 1]

LANES = 128                 # TPU lane width (fast axis)
SUBLANES = 8                # sublane width (slow axis)
DEFAULT_TILE_ROWS = 2048    # rows of 128 lanes per grid step (1 MiB f32 tile)


def _round_up(x, m):
    return ((x + m - 1) // m) * m


def _affine_kernel(w_ref, b_ref, x_ref, o_ref):
    """o = x * w + b — the whole activation-free 5-layer Linear chain, folded.

    w_ref / b_ref are [1, 1] scalars in SMEM; x_ref / o_ref are lane-dense
    [tm, 128] VMEM tiles.  Pure VPU work, HBM-bandwidth bound.
    """
    w = w_ref[0, 0]          # hoist scalar loads once per body
    b = b_ref[0, 0]
    o_ref[...] = x_ref[...] * w + b


def fold_params(params):
    """Collapse the Linear(1,20)->...->Linear(64,1) chain into y = x*w + b."""
    w_eff, b_eff = params[0]
    for w, b in params[1:]:
        b_eff = jnp.dot(b_eff, w, precision=jax.lax.Precision.HIGHEST) + b
        w_eff = jnp.dot(w_eff, w, precision=jax.lax.Precision.HIGHEST)
    return w_eff.reshape(1, 1), b_eff.reshape(1, 1)


@functools.partial(jax.jit, static_argnames=("tile_rows",))
def line_forward(x, params, tile_rows=DEFAULT_TILE_ROWS):
    """x: [N, 1] float32.  params: list of (W[in,out], b[1,out]) pairs."""
    n = x.shape[0]
    w_eff, b_eff = fold_params(params)

    # Lane-dense layout: [N, 1] -> flat [N] -> tiny tail pad to a multiple of
    # 8*128 -> [m_padded, 128].  Pad is < 1024 elements regardless of N.
    m = pl.cdiv(n, LANES)
    m_padded = _round_up(max(m, 1), SUBLANES)
    padded_n = m_padded * LANES

    # Tile rows: sublane-aligned, capped; keep the grid >= 2 steps when there
    # is enough data so both v7x TensorCores get work via "parallel" semantics.
    tm = min(int(tile_rows), m_padded)
    if m_padded > SUBLANES:
        tm = min(tm, _round_up(pl.cdiv(m_padded, 2), SUBLANES))
    tm = min(_round_up(max(tm, 1), SUBLANES), m_padded)

    grid = (pl.cdiv(m_padded, tm),)   # partial last block handled by Pallas
                                      # (OOB reads padded, OOB writes masked)

    x_flat = jnp.pad(x.reshape(-1), (0, padded_n - n)).reshape(m_padded, LANES)

    smem_spec = pl.BlockSpec(memory_space=pltpu.MemorySpace.SMEM)
    tile_spec = pl.BlockSpec((tm, LANES), lambda i: (i, 0))

    y = pl.pallas_call(
        _affine_kernel,
        out_shape=jax.ShapeDtypeStruct((m_padded, LANES), jnp.float32),
        grid=grid,
        in_specs=[smem_spec, smem_spec, tile_spec],
        out_specs=tile_spec,
        compiler_params=pltpu.CompilerParams(
            dimension_semantics=("parallel",)),
        cost_estimate=pl.CostEstimate(
            flops=2 * padded_n,
            transcendentals=0,
            bytes_accessed=8 * padded_n),
    )(w_eff, b_eff, x_flat)

    # TODO(synk): the final slice+reshape back to [N, 1] is one extra HBM copy;
    # callers that can consume the flat/padded layout should skip it.
    return y.reshape(-1)[:n].reshape(n, 1)


def init_params(key):
    """Deterministic init mimicking torch.nn.Linear default (uniform ±1/sqrt(fan_in))."""
    params = []
    for fan_in, fan_out in zip(LAYER_SIZES[:-1], LAYER_SIZES[1:]):
        key, kw, kb = jax.random.split(key, 3)
        bound = 1.0 / (fan_in ** 0.5)
        # stored as [fan_in, fan_out] so forward does x @ W (== x @ torch_W.T)
        w = jax.random.uniform(kw, (fan_in, fan_out), jnp.float32, -bound, bound)
        b = jax.random.uniform(kb, (1, fan_out), jnp.float32, -bound, bound)
        params.append((w, b))
    return params


def reference_forward(x, params):
    """Layer-by-layer plain-JAX reference (full f32 precision)."""
    h = x
    for w, b in params:
        h = jnp.dot(h, w, precision=jax.lax.Precision.HIGHEST) + b
    return h


if __name__ == "__main__":
    key = jax.random.PRNGKey(0)
    key, kx = jax.random.split(key)
    params = init_params(key)

    # Small smoke test matching the module's expected [N, 1] input.
    batch = 8
    x = jax.random.normal(kx, (batch, 1), jnp.float32)
    y = jax.block_until_ready(line_forward(x, params))
    y_ref = reference_forward(x, params)
    assert y.shape == (batch, 1)
    assert jnp.allclose(y, y_ref, atol=1e-5, rtol=1e-4), "mismatch vs reference (small)"

    # Awkward larger batch: exercises the 2-step grid, the tiny tail pad, and
    # the masked partial last block (m_padded not divisible by tm).
    key, kx2 = jax.random.split(key)
    n_big = 123_457
    x_big = jax.random.normal(kx2, (n_big, 1), jnp.float32)
    y_big = jax.block_until_ready(line_forward(x_big, params))
    y_big_ref = reference_forward(x_big, params)
    assert y_big.shape == (n_big, 1)
    assert jnp.allclose(y_big, y_big_ref, atol=1e-5, rtol=1e-4), "mismatch vs reference (big)"

    print("KERNEL_OK")
</pallas_src>

<mosaic_0001>
module attributes {stable_mosaic.version = 11 : i64} {
  func.func @_affine_kernel(%arg0: i32, %arg1: memref<1x1xf32, #tpu.memory_space<smem>>, %arg2: memref<1x1xf32, #tpu.memory_space<smem>>, %arg3: memref<8x128xf32, #tpu.memory_space<vmem>>, %arg4: memref<8x128xf32, #tpu.memory_space<vmem>>) attributes {dimension_semantics = [#tpu.dimension_semantics<parallel>], iteration_bounds = array<i64: 1>, scalar_prefetch = 0 : i64, scratch_operands = 0 : i64, tpu.core_type = #tpu.core_type<tc>, window_params = [{transform_indices = @transform_0, window_bounds = array<i64: 1, 1>}, {transform_indices = @transform_1, window_bounds = array<i64: 1, 1>}, {transform_indices = @transform_2, window_bounds = array<i64: 8, 128>}, {transform_indices = @transform_3, window_bounds = array<i64: 8, 128>}]} {
    %c0 = arith.constant 0 : index
    %c0_0 = arith.constant 0 : index
    %0 = memref.load %arg1[%c0, %c0_0] : memref<1x1xf32, #tpu.memory_space<smem>>
    %c0_1 = arith.constant 0 : index
    %c0_2 = arith.constant 0 : index
    %1 = memref.load %arg2[%c0_1, %c0_2] : memref<1x1xf32, #tpu.memory_space<smem>>
    %c0_3 = arith.constant 0 : index
    %c0_4 = arith.constant 0 : index
    %2 = vector.load %arg3[%c0_3, %c0_4] : memref<8x128xf32, #tpu.memory_space<vmem>>, vector<8x128xf32>
    %3 = vector.broadcast %0 : f32 to vector<8x128xf32>
    %4 = arith.mulf %2, %3 : vector<8x128xf32>
    %5 = vector.broadcast %1 : f32 to vector<8x128xf32>
    %6 = arith.addf %4, %5 : vector<8x128xf32>
    %c0_5 = arith.constant 0 : index
    %c0_6 = arith.constant 0 : index
    %7 = vector.load %arg4[%c0_5, %c0_6] : memref<8x128xf32, #tpu.memory_space<vmem>>, vector<8x128xf32>
    tpu.vector_store %arg4[%c0_5, %c0_6], %6 {strides = array<i32>} : memref<8x128xf32, #tpu.memory_space<vmem>>, vector<8x128xf32>,
    return
  }
  func.func @transform_0(%arg0: i32) -> (i32, i32) {
    %c0_i32 = arith.constant 0 : i32
    %c0_i32_0 = arith.constant 0 : i32
    %c0_i32_1 = arith.constant 0 : i32
    return %c0_i32, %c0_i32_0 : i32, i32
  }
  func.func @transform_1(%arg0: i32) -> (i32, i32) {
    %c0_i32 = arith.constant 0 : i32
    %c0_i32_0 = arith.constant 0 : i32
    %c0_i32_1 = arith.constant 0 : i32
    return %c0_i32, %c0_i32_0 : i32, i32
  }
  func.func @transform_2(%arg0: i32) -> (i32, i32) {
    %c0_i32 = arith.constant 0 : i32
    %c0_i32_0 = arith.constant 0 : i32
    return %arg0, %c0_i32 : i32, i32
  }
  func.func @transform_3(%arg0: i32) -> (i32, i32) {
    %c0_i32 = arith.constant 0 : i32
    %c0_i32_0 = arith.constant 0 : i32
    return %arg0, %c0_i32 : i32, i32
  }
}

</mosaic_0001>

<llo_original>
// kernel: line_forward.1
$region0: #{line_forward.1}
  #allocation0 [shape = 'u32[]', space=smem, size = 0x4, offset = 0x4, fixed_abs, tag = 'smem constant byte address 0x4 - core index']
  #allocation1 [shape = 'u32[144,128]{1,0:T(1,128)}', space=vmem, size = 0x12000, scoped, tag = 'internal scratch']
  #allocation2 [shape = 'f32[1,1]{1,0:T(1,128)S(6)}', space=smem, size = 0x200, scoped, tag = 'scoped memory for line_forward.1']
  #allocation3 [shape = 'f32[1,1]{1,0:T(1,128)S(6)}', space=smem, size = 0x200, scoped, tag = 'scoped memory for line_forward.1']
  %s0 = inlined_call_operand.<no memory space> [shape: f32[1,1], index: 0, kind: input, shape index: {}]
  %s1 = inlined_call_operand.<no memory space> [shape: f32[1,1], index: 1, kind: input, shape index: {}]
  %s2 = inlined_call_operand.vmem [shape: f32[8,128], index: 2, kind: input, shape index: {}]
  %s3 = inlined_call_operand.vmem [shape: f32[8,128], index: 3, kind: output, shape index: {}]
  %s4 = sld [smem:[#allocation0]]
  $region22: #{line_forward.1} parent=0
    _
  %s6 = ssub.s32 1, %s4
  %s7 = scalar_select 0, %s6, %s4
  %8 = sst [smem:[#allocation2]] %s0
  %9 = sst [smem:[#allocation3]] %s1
  // Predicated region
  $region2: #{line_forward.1} parent=0 // pred_check
    _
  $region3: #{line_forward.1} parent=0 // pred_check_branch
    %11 = sbr.rel (0) target = $region5
  $region4: #{line_forward.1} parent=0 // pred_region
    _
  $region5: #{line_forward.1} parent=0 // pred_fallthru
    _
  // Predicated region
  $region6: #{line_forward.1} parent=0 // pred_check
    _
  $region7: #{line_forward.1} parent=0 // pred_check_branch
    %13 = sbr.rel (0) target = $region9
  $region8: #{line_forward.1} parent=0 // pred_region
    _
  $region9: #{line_forward.1} parent=0 // pred_fallthru
    _
  // Predicated region
  $region10: #{line_forward.1} parent=0 // pred_check
    _
  $region11: #{line_forward.1} parent=0 // pred_check_branch
    %15 = sbr.rel (0) target = $region13
  $region12: #{line_forward.1} parent=0 // pred_region
    _
  $region13: #{line_forward.1} parent=0 // pred_fallthru
    _
  %s16 = sld [smem:[#allocation2]]
  %s17 = sld [smem:[#allocation3]]
  %v18 = vld [vmem:[%s2] sm:$0xff]
  %v19 = vstv %s16
  %v20 = vmul.f32 %v18, %v19
  %v21 = vstv %s17
  %v22 = vadd.f32 %v20, %v21
  %23 = vst [vmem:[%s3] sm:$0xff] %v22
  // Predicated region
  $region14: #{line_forward.1} parent=0 // pred_check
    _
  $region15: #{line_forward.1} parent=0 // pred_check_branch
    %25 = sbr.rel (0) target = $region17
  $region16: #{line_forward.1} parent=0 // pred_region
    _
  $region17: #{line_forward.1} parent=0 // pred_fallthru
    _
  // Predicated region
  $region18: #{line_forward.1} parent=0 // pred_check
    _
  $region19: #{line_forward.1} parent=0 // pred_check_branch
    %27 = sbr.rel (0) target = $region21
  $region20: #{line_forward.1} parent=0 // pred_region
    _
  $region21: #{line_forward.1} parent=0 // pred_fallthru
    _

</llo_original>
